<compile_context>
chip_gen: v5e
topology: v5e:2x2
jax: 0.10.0
libtpu: 0.0.40
codegen_flags: <defaults>
</compile_context>

<pallas_src>
import jax
import jax.numpy as jnp
from jax.experimental import pallas as pl
from jax.experimental.pallas import tpu as pltpu


def _round_up(x, m):
    return ((x + m - 1) // m) * m


# ----------------------- conv1d + bias + ReLU + global max pool -----------------------

def _conv_relu_maxpool_kernel(x_ref, w_ref, b_ref, o_ref):
    """Per tile: per-tap batched matmul (M = tile_n*l_out) -> +bias -> ReLU -> max over L."""
    tn, l_pad, c_in = x_ref.shape
    k, _, c_out = w_ref.shape
    l_out = l_pad - k + 1

    acc = jnp.zeros((tn * l_out, c_out), jnp.float32)
    for j in range(k):                                       # static unroll over conv taps
        xj = x_ref[:, pl.ds(j, l_out), :]                    # (tn, l_out, c_in) f32
        xj = xj.reshape(tn * l_out, c_in).astype(jnp.bfloat16)
        acc = acc + jnp.dot(xj, w_ref[j],                    # (tn*l_out, c_out) f32 acc
                            preferred_element_type=jnp.float32)

    acc = jnp.maximum(acc + b_ref[...], 0.0)                 # single fused bias + ReLU
    o_ref[...] = jnp.max(acc.reshape(tn, l_out, c_out), axis=1)   # global max pool


def conv_relu_maxpool(x_pad, w, b, *, tile_n):
    """x_pad: (N_pad, L_pad, C_in_pad) f32; w: (k, C_in_pad, C_out_pad) bf16; b: (1, C_out_pad) f32."""
    n_pad, l_pad, c_in = x_pad.shape
    k, _, c_out = w.shape
    assert n_pad % tile_n == 0 and c_in % 128 == 0 and c_out % 128 == 0
    return pl.pallas_call(
        _conv_relu_maxpool_kernel,
        out_shape=jax.ShapeDtypeStruct((n_pad, c_out), jnp.float32),
        grid_spec=pltpu.PrefetchScalarGridSpec(
            num_scalar_prefetch=0,
            grid=(n_pad // tile_n,),
            in_specs=[
                pl.BlockSpec((tile_n, l_pad, c_in), lambda i: (i, 0, 0)),
                pl.BlockSpec((k, c_in, c_out), lambda i: (0, 0, 0)),
                pl.BlockSpec((1, c_out), lambda i: (0, 0)),
            ],
            out_specs=pl.BlockSpec((tile_n, c_out), lambda i: (i, 0)),
        ),
        compiler_params=pltpu.CompilerParams(dimension_semantics=("parallel",)),
    )(x_pad, w, b)


# ----------------------- fused concat + linear (text @ Wt + audio @ Wa + b) -----------------------

def _fused_linear_kernel(t_ref, a_ref, wt_ref, wa_ref, b_ref, o_ref):
    acc = jnp.dot(t_ref[...], wt_ref[...], preferred_element_type=jnp.float32)
    acc = acc + jnp.dot(a_ref[...], wa_ref[...], preferred_element_type=jnp.float32)
    o_ref[...] = acc + b_ref[...]


def fused_linear(text_feat, audio_feat, w_text, w_audio, b, *, tile_m=256):
    """text_feat: (M, Dt), audio_feat: (M, Da) f32; weights bf16 (D*, 128); b: (1, 128) f32."""
    m = text_feat.shape[0]
    tile_m = min(tile_m, _round_up(m, 8))
    m_pad = _round_up(m, tile_m)
    t_p = jnp.pad(text_feat, ((0, m_pad - m), (0, 0))).astype(jnp.bfloat16)
    a_p = jnp.pad(audio_feat, ((0, m_pad - m), (0, 0))).astype(jnp.bfloat16)
    d_t, d_out = w_text.shape
    d_a = w_audio.shape[0]
    out = pl.pallas_call(
        _fused_linear_kernel,
        out_shape=jax.ShapeDtypeStruct((m_pad, d_out), jnp.float32),
        grid_spec=pltpu.PrefetchScalarGridSpec(
            num_scalar_prefetch=0,
            grid=(m_pad // tile_m,),
            in_specs=[
                pl.BlockSpec((tile_m, d_t), lambda i: (i, 0)),
                pl.BlockSpec((tile_m, d_a), lambda i: (i, 0)),
                pl.BlockSpec((d_t, d_out), lambda i: (0, 0)),
                pl.BlockSpec((d_a, d_out), lambda i: (0, 0)),
                pl.BlockSpec((1, d_out), lambda i: (0, 0)),
            ],
            out_specs=pl.BlockSpec((tile_m, d_out), lambda i: (i, 0)),
        ),
        compiler_params=pltpu.CompilerParams(dimension_semantics=("parallel",)),
    )(t_p, a_p, w_text, w_audio, b)
    return out[:m]


# ----------------------------------- parameters -----------------------------------

def init_params(kernel_sizes, num_channel):
    """Deterministic synthetic parameters, logical shapes matching the PyTorch module."""
    key = jax.random.PRNGKey(42)
    params = {"conv_w": [], "conv_b": []}
    for k in kernel_sizes:
        key, kw, kb = jax.random.split(key, 3)
        params["conv_w"].append(
            jax.random.normal(kw, (k, 300, num_channel), jnp.float32) * 0.05)
        params["conv_b"].append(
            jax.random.normal(kb, (1, num_channel), jnp.float32) * 0.05)
    key, kw, kb = jax.random.split(key, 3)
    params["lin_w"] = jax.random.normal(kw, (1911, 7), jnp.float32) * 0.02
    params["lin_b"] = jax.random.normal(kb, (1, 7), jnp.float32) * 0.02
    return params


def prepare_params(params, kernel_sizes, num_channel):
    """Zero-pad all feature dims to multiples of 128 and split the linear weight into
    a text part (re-indexed to the padded text-feature layout) and an audio part."""
    c_in, c_in_pad = 300, _round_up(300, 128)                  # 384
    c_out, c_out_pad = num_channel, _round_up(num_channel, 128)  # 128
    d_audio, d_audio_pad = 1611, _round_up(1611, 128)          # 1664
    d_out, d_out_pad = 7, 128
    nk = len(kernel_sizes)

    conv_w = [jnp.pad(w, ((0, 0), (0, c_in_pad - c_in), (0, c_out_pad - c_out)))
              .astype(jnp.bfloat16) for w in params["conv_w"]]
    conv_b = [jnp.pad(b, ((0, 0), (0, c_out_pad - c_out))) for b in params["conv_b"]]

    w_text = jnp.zeros((nk * c_out_pad, d_out_pad), jnp.float32)
    for ci in range(nk):
        w_text = w_text.at[ci * c_out_pad:ci * c_out_pad + c_out, :d_out].set(
            params["lin_w"][ci * c_out:(ci + 1) * c_out, :])
    w_audio = jnp.zeros((d_audio_pad, d_out_pad), jnp.float32)
    w_audio = w_audio.at[:d_audio, :d_out].set(params["lin_w"][nk * c_out:, :])
    b_lin = jnp.zeros((1, d_out_pad), jnp.float32).at[:, :d_out].set(params["lin_b"])

    return {"conv_w": conv_w, "conv_b": conv_b,
            "w_text": w_text.astype(jnp.bfloat16),
            "w_audio": w_audio.astype(jnp.bfloat16),
            "lin_b": b_lin}


# ------------------------------------- forward -------------------------------------

def utterance_emo_clf_forward(params, text_emb, audio_emb, num_utt, kernel_sizes):
    """
    text_emb:  (N, L, 300) f32  (all utterances of all dialogues, concatenated)
    audio_emb: (B, T, 1611) f32
    num_utt:   python list of ints, sum == N, max == T
    returns:   (B, T, 7) f32
    """
    n_utt, _, c_in = text_emb.shape
    c_in_pad = params["conv_w"][0].shape[1]
    tile_n = min(128, _round_up(max(n_utt, 1), 8))
    n_pad = _round_up(n_utt, tile_n)

    # TextCNNEncoder: conv -> relu -> global max pool -> concat (C_out padded to 128 lanes)
    feats = []
    for k, w, b in zip(kernel_sizes, params["conv_w"], params["conv_b"]):
        pad = k // 2                                      # matches nn.Conv1d(padding=k//2)
        x_pad = jnp.pad(text_emb,
                        ((0, n_pad - n_utt), (pad, pad), (0, c_in_pad - c_in)))
        feats.append(conv_relu_maxpool(x_pad, w, b, tile_n=tile_n)[:n_utt])
    text_feat = jnp.concatenate(feats, axis=1)            # (N, len(ks) * 128)

    # torch.split + pad_sequence(batch_first=True)  (pure glue)
    b_sz, t_len, d_audio = audio_emb.shape
    f_txt = text_feat.shape[1]
    padded = jnp.zeros((b_sz, t_len, f_txt), jnp.float32)
    start = 0
    for bi, nu in enumerate(num_utt):
        padded = padded.at[bi, :nu].set(text_feat[start:start + nu])
        start += nu

    # Fused concat + linear: cat(text, audio) @ W == text @ W_text + audio @ W_audio
    # (the (B, T, 1911) concatenated tensor is never written to HBM).
    d_audio_pad = params["w_audio"].shape[0]
    audio_p = jnp.pad(audio_emb, ((0, 0), (0, 0), (0, d_audio_pad - d_audio)))
    # nn.Dropout is identity at inference; TODO(synk): training-mode dropout (random masking) not implemented.
    out = fused_linear(padded.reshape(b_sz * t_len, f_txt),
                       audio_p.reshape(b_sz * t_len, d_audio_pad),
                       params["w_text"], params["w_audio"], params["lin_b"])
    return out[:, :7].reshape(b_sz, t_len, 7)


# --------------------------------------- main ---------------------------------------

if __name__ == "__main__":
    kernel_sizes = [3, 4, 5]
    num_channel = 100            # 3 * 100 + 1611 = 1911 == nn.Linear(1911, 7) input dim
    num_utt = [3, 2]             # B = 2 dialogues, T = 3 max utterances, N = 5 total
    N, L = sum(num_utt), 8
    B, T = len(num_utt), max(num_utt)

    key = jax.random.PRNGKey(0)
    k_text, k_audio = jax.random.split(key)
    text_emb = jax.random.normal(k_text, (N, L, 300), jnp.float32)
    audio_emb = jax.random.normal(k_audio, (B, T, 1611), jnp.float32)

    params = init_params(kernel_sizes, num_channel)
    prepared = prepare_params(params, kernel_sizes, num_channel)
    out = utterance_emo_clf_forward(prepared, text_emb, audio_emb, num_utt, kernel_sizes)
    out = jax.block_until_ready(out)
    assert out.shape == (B, T, 7), out.shape
    assert out.dtype == jnp.float32
    print("KERNEL_OK")
</pallas_src>

<mosaic_0001>
module attributes {stable_mosaic.version = 11 : i64} {
  func.func @_conv_relu_maxpool_kernel(%arg0: i32, %arg1: memref<8x10x384xf32, #tpu.memory_space<vmem>>, %arg2: memref<3x384x128xbf16, #tpu.memory_space<vmem>>, %arg3: memref<1x128xf32, #tpu.memory_space<vmem>>, %arg4: memref<8x128xf32, #tpu.memory_space<vmem>>) attributes {dimension_semantics = [#tpu.dimension_semantics<parallel>], iteration_bounds = array<i64: 1>, scalar_prefetch = 0 : i64, scratch_operands = 0 : i64, tpu.core_type = #tpu.core_type<tc>, window_params = [{transform_indices = @transform_0, window_bounds = array<i64: 8, 10, 384>}, {pipeline_mode = #tpu.pipeline_mode<synchronous>, transform_indices = @transform_1, window_bounds = array<i64: 3, 384, 128>}, {pipeline_mode = #tpu.pipeline_mode<synchronous>, transform_indices = @transform_2, window_bounds = array<i64: 1, 128>}, {transform_indices = @transform_3, window_bounds = array<i64: 8, 128>}]} {
    %cst = arith.constant 0.000000e+00 : f32
    %0 = vector.broadcast %cst : f32 to vector<64x128xf32>
    %c0 = arith.constant 0 : index
    %c0_0 = arith.constant 0 : index
    %c0_1 = arith.constant 0 : index
    %1 = vector.load %arg1[%c0, %c0_0, %c0_1] : memref<8x10x384xf32, #tpu.memory_space<vmem>>, vector<8x8x384xf32>
    %2 = vector.shape_cast %1 : vector<8x8x384xf32> to vector<64x384xf32>
    %3 = arith.truncf %2 : vector<64x384xf32> to vector<64x384xbf16>
    %c0_2 = arith.constant 0 : index
    %c0_3 = arith.constant 0 : index
    %c0_4 = arith.constant 0 : index
    %4 = vector.load %arg2[%c0_2, %c0_3, %c0_4] : memref<3x384x128xbf16, #tpu.memory_space<vmem>>, vector<1x384x128xbf16>
    %5 = vector.shape_cast %4 : vector<1x384x128xbf16> to vector<384x128xbf16>
    %cst_5 = arith.constant dense<0.000000e+00> : vector<64x128xf32>
    %6 = tpu.matmul %3, %5, %cst_5 {dimension_numbers = #tpu.dot_dimension_numbers<[1], [0], [0], [1], [0, 0, 1, 1], [], []>} : vector<64x384xbf16>, vector<384x128xbf16>, vector<64x128xf32> -> vector<64x128xf32>
    %7 = arith.addf %0, %6 : vector<64x128xf32>
    %c0_6 = arith.constant 0 : index
    %c1 = arith.constant 1 : index
    %c0_7 = arith.constant 0 : index
    %8 = vector.load %arg1[%c0_6, %c1, %c0_7] : memref<8x10x384xf32, #tpu.memory_space<vmem>>, vector<8x8x384xf32>
    %9 = vector.shape_cast %8 : vector<8x8x384xf32> to vector<64x384xf32>
    %10 = arith.truncf %9 : vector<64x384xf32> to vector<64x384xbf16>
    %c1_8 = arith.constant 1 : index
    %c0_9 = arith.constant 0 : index
    %c0_10 = arith.constant 0 : index
    %11 = vector.load %arg2[%c1_8, %c0_9, %c0_10] : memref<3x384x128xbf16, #tpu.memory_space<vmem>>, vector<1x384x128xbf16>
    %12 = vector.shape_cast %11 : vector<1x384x128xbf16> to vector<384x128xbf16>
    %cst_11 = arith.constant dense<0.000000e+00> : vector<64x128xf32>
    %13 = tpu.matmul %10, %12, %cst_11 {dimension_numbers = #tpu.dot_dimension_numbers<[1], [0], [0], [1], [0, 0, 1, 1], [], []>} : vector<64x384xbf16>, vector<384x128xbf16>, vector<64x128xf32> -> vector<64x128xf32>
    %14 = arith.addf %7, %13 : vector<64x128xf32>
    %c0_12 = arith.constant 0 : index
    %c2 = arith.constant 2 : index
    %c0_13 = arith.constant 0 : index
    %15 = vector.load %arg1[%c0_12, %c2, %c0_13] : memref<8x10x384xf32, #tpu.memory_space<vmem>>, vector<8x8x384xf32>
    %16 = vector.shape_cast %15 : vector<8x8x384xf32> to vector<64x384xf32>
    %17 = arith.truncf %16 : vector<64x384xf32> to vector<64x384xbf16>
    %c2_14 = arith.constant 2 : index
    %c0_15 = arith.constant 0 : index
    %c0_16 = arith.constant 0 : index
    %18 = vector.load %arg2[%c2_14, %c0_15, %c0_16] : memref<3x384x128xbf16, #tpu.memory_space<vmem>>, vector<1x384x128xbf16>
    %19 = vector.shape_cast %18 : vector<1x384x128xbf16> to vector<384x128xbf16>
    %cst_17 = arith.constant dense<0.000000e+00> : vector<64x128xf32>
    %20 = tpu.matmul %17, %19, %cst_17 {dimension_numbers = #tpu.dot_dimension_numbers<[1], [0], [0], [1], [0, 0, 1, 1], [], []>} : vector<64x384xbf16>, vector<384x128xbf16>, vector<64x128xf32> -> vector<64x128xf32>
    %21 = arith.addf %14, %20 : vector<64x128xf32>
    %c0_18 = arith.constant 0 : index
    %c0_19 = arith.constant 0 : index
    %22 = vector.load %arg3[%c0_18, %c0_19] : memref<1x128xf32, #tpu.memory_space<vmem>>, vector<1x128xf32>
    %23 = vector.broadcast %22 : vector<1x128xf32> to vector<64x128xf32>
    %24 = arith.addf %21, %23 : vector<64x128xf32>
    %cst_20 = arith.constant 0.000000e+00 : f32
    %25 = vector.broadcast %cst_20 : f32 to vector<64x128xf32>
    %26 = arith.maximumf %24, %25 : vector<64x128xf32>
    %27 = vector.shape_cast %26 : vector<64x128xf32> to vector<8x8x128xf32>
    %cst_21 = arith.constant dense<0xFF800000> : vector<8x128xf32>
    %28 = vector.multi_reduction <maximumf>, %27, %cst_21 [1] : vector<8x8x128xf32> to vector<8x128xf32>
    %c0_22 = arith.constant 0 : index
    %c0_23 = arith.constant 0 : index
    %29 = vector.load %arg4[%c0_22, %c0_23] : memref<8x128xf32, #tpu.memory_space<vmem>>, vector<8x128xf32>
    tpu.vector_store %arg4[%c0_22, %c0_23], %28 {strides = array<i32>} : memref<8x128xf32, #tpu.memory_space<vmem>>, vector<8x128xf32>,
    return
  }
  func.func @transform_0(%arg0: i32) -> (i32, i32, i32) {
    %c0_i32 = arith.constant 0 : i32
    %c0_i32_0 = arith.constant 0 : i32
    %c0_i32_1 = arith.constant 0 : i32
    return %arg0, %c0_i32, %c0_i32_0 : i32, i32, i32
  }
  func.func @transform_1(%arg0: i32) -> (i32, i32, i32) {
    %c0_i32 = arith.constant 0 : i32
    %c0_i32_0 = arith.constant 0 : i32
    %c0_i32_1 = arith.constant 0 : i32
    %c0_i32_2 = arith.constant 0 : i32
    return %c0_i32, %c0_i32_0, %c0_i32_1 : i32, i32, i32
  }
  func.func @transform_2(%arg0: i32) -> (i32, i32) {
    %c0_i32 = arith.constant 0 : i32
    %c0_i32_0 = arith.constant 0 : i32
    %c0_i32_1 = arith.constant 0 : i32
    return %c0_i32, %c0_i32_0 : i32, i32
  }
  func.func @transform_3(%arg0: i32) -> (i32, i32) {
    %c0_i32 = arith.constant 0 : i32
    %c0_i32_0 = arith.constant 0 : i32
    return %arg0, %c0_i32 : i32, i32
  }
}

</mosaic_0001>

<llo_original>
// kernel: tpu_custom_call.1
$region0: #{tpu_custom_call.1}
  #allocation0 [shape = 'u32[]', space=smem, size = 0x4, offset = 0x4, fixed_abs, tag = 'smem constant byte address 0x4 - core index']
  #allocation1 [shape = 'u32[72,128]{1,0:T(1,128)}', space=vmem, size = 0x9000, scoped, tag = 'internal scratch']
  %s0 = inlined_call_operand.vmem [shape: f32[8,10,384], index: 0, kind: input, shape index: {}]
  %s1 = inlined_call_operand.vmem [shape: bf16[3,384,128], index: 1, kind: input, shape index: {}]
  %s2 = inlined_call_operand.vmem [shape: f32[1,128], index: 2, kind: input, shape index: {}]
  %s3 = inlined_call_operand.hbm [shape: f32[8,128], index: 3, kind: output, shape index: {}]
  %s4 = sld [smem:[#allocation0]]
  $region22: #{tpu_custom_call.1} parent=0
    _
  %s6 = ssub.s32 1, %s4
  %s7 = scalar_select 0, %s6, %s4
  $region1: #{tpu_custom_call.1} parent=0
    #allocation2 [shape = 'u8[4096]{0}', space=vmem, size = 0x1000, scoped, tag = 'output window, operand 0, single buffered']
    #allocation3 [shape = 's32[1]{0}', space=sflag, size = 0x4, scoped, tag = 'scoped memory for tpu_custom_call.1']
    %8 = vsyncpa [#allocation3], 0
    // Predicated region
    $region2: #{tpu_custom_call.1} parent=1 // pred_check
      _
    $region3: #{tpu_custom_call.1} parent=1 // pred_check_branch
      %10 = sbr.rel (0) target = $region5
    $region4: #{tpu_custom_call.1} parent=1 // pred_region
      _
    $region5: #{tpu_custom_call.1} parent=1 // pred_fallthru
      _
    // Predicated region
    $region6: #{tpu_custom_call.1} parent=1 // pred_check
      _
    $region7: #{tpu_custom_call.1} parent=1 // pred_check_branch
      %12 = sbr.rel (0) target = $region9
    $region8: #{tpu_custom_call.1} parent=1 // pred_region
      _
    $region9: #{tpu_custom_call.1} parent=1 // pred_fallthru
      _
    // Predicated region
    $region10: #{tpu_custom_call.1} parent=1 // pred_check
      _
    $region11: #{tpu_custom_call.1} parent=1 // pred_check_branch
      %14 = sbr.rel (0) target = $region13
    $region12: #{tpu_custom_call.1} parent=1 // pred_region
      _
    $region13: #{tpu_custom_call.1} parent=1 // pred_fallthru
      _
    %v15 = vld [vmem:[%s0] sm:$0xff]
    %v16 = vld [vmem:[%s0 + $0x8] sm:$0xff]
    %v17 = vld [vmem:[%s0 + $0x10] sm:$0xff]
    %v18 = vld [vmem:[%s0 + $0x30] sm:$0xff]
    %v19 = vld [vmem:[%s0 + $0x38] sm:$0xff]
    %v20 = vld [vmem:[%s0 + $0x40] sm:$0xff]
    %v21 = vld [vmem:[%s0 + $0x60] sm:$0xff]
    %v22 = vld [vmem:[%s0 + $0x68] sm:$0xff]
    %v23 = vld [vmem:[%s0 + $0x70] sm:$0xff]
    %v24 = vld [vmem:[%s0 + $0x90] sm:$0xff]
    %v25 = vld [vmem:[%s0 + $0x98] sm:$0xff]
    %v26 = vld [vmem:[%s0 + $0xa0] sm:$0xff]
    %v27 = vld [vmem:[%s0 + $0xc0] sm:$0xff]
    %v28 = vld [vmem:[%s0 + $0xc8] sm:$0xff]
    %v29 = vld [vmem:[%s0 + $0xd0] sm:$0xff]
    %v30 = vld [vmem:[%s0 + $0xf0] sm:$0xff]
    %v31 = vld [vmem:[%s0 + $0xf8] sm:$0xff]
    %v32 = vld [vmem:[%s0 + $0x100] sm:$0xff]
    %v33 = vld [vmem:[%s0 + $0x120] sm:$0xff]
    %v34 = vld [vmem:[%s0 + $0x128] sm:$0xff]
    %v35 = vld [vmem:[%s0 + $0x130] sm:$0xff]
    %v36 = vld [vmem:[%s0 + $0x150] sm:$0xff]
    %v37 = vld [vmem:[%s0 + $0x158] sm:$0xff]
    %v38 = vld [vmem:[%s0 + $0x160] sm:$0xff]
    %v39 = vpack.c.bf16 %v18, %v15
    %v40 = vpack.c.bf16 %v19, %v16
    %v41 = vpack.c.bf16 %v20, %v17
    %v42 = vpack.c.bf16 %v24, %v21
    %v43 = vpack.c.bf16 %v25, %v22
    %v44 = vpack.c.bf16 %v26, %v23
    %v45 = vpack.c.bf16 %v30, %v27
    %v46 = vpack.c.bf16 %v31, %v28
    %v47 = vpack.c.bf16 %v32, %v29
    %v48 = vpack.c.bf16 %v36, %v33
    %v49 = vpack.c.bf16 %v37, %v34
    %v50 = vpack.c.bf16 %v38, %v35
    %v51 = vld [vmem:[%s1] sm:$0xf]
    %v52 = vld [vmem:[%s1 + $0x4] sm:$0xf]
    %v53 = vld [vmem:[%s1 + $0x8] sm:$0xf]
    %v54 = vld [vmem:[%s1 + $0xc] sm:$0xf]
    %v55 = vld [vmem:[%s1 + $0x10] sm:$0xf]
    %v56 = vld [vmem:[%s1 + $0x14] sm:$0xf]
    %v57 = vld [vmem:[%s1 + $0x18] sm:$0xf]
    %v58 = vld [vmem:[%s1 + $0x1c] sm:$0xf]
    %v59 = vld [vmem:[%s1 + $0x20] sm:$0xf]
    %v60 = vld [vmem:[%s1 + $0x24] sm:$0xf]
    %v61 = vld [vmem:[%s1 + $0x28] sm:$0xf]
    %v62 = vld [vmem:[%s1 + $0x2c] sm:$0xf]
    %v63 = vld [vmem:[%s1 + $0x30] sm:$0xf]
    %v64 = vld [vmem:[%s1 + $0x34] sm:$0xf]
    %v65 = vld [vmem:[%s1 + $0x38] sm:$0xf]
    %v66 = vld [vmem:[%s1 + $0x3c] sm:$0xf]
    %v67 = vld [vmem:[%s1 + $0x40] sm:$0xf]
    %v68 = vld [vmem:[%s1 + $0x44] sm:$0xf]
    %v69 = vld [vmem:[%s1 + $0x48] sm:$0xf]
    %v70 = vld [vmem:[%s1 + $0x4c] sm:$0xf]
    %v71 = vld [vmem:[%s1 + $0x50] sm:$0xf]
    %v72 = vld [vmem:[%s1 + $0x54] sm:$0xf]
    %v73 = vld [vmem:[%s1 + $0x58] sm:$0xf]
    %v74 = vld [vmem:[%s1 + $0x5c] sm:$0xf]
    %v75 = vld [vmem:[%s1 + $0x60] sm:$0xf]
    %v76 = vld [vmem:[%s1 + $0x64] sm:$0xf]
    %v77 = vld [vmem:[%s1 + $0x68] sm:$0xf]
    %v78 = vld [vmem:[%s1 + $0x6c] sm:$0xf]
    %v79 = vld [vmem:[%s1 + $0x70] sm:$0xf]
    %v80 = vld [vmem:[%s1 + $0x74] sm:$0xf]
    %v81 = vld [vmem:[%s1 + $0x78] sm:$0xf]
    %v82 = vld [vmem:[%s1 + $0x7c] sm:$0xf]
    %v83 = vld [vmem:[%s1 + $0x80] sm:$0xf]
    %v84 = vld [vmem:[%s1 + $0x84] sm:$0xf]
    %v85 = vld [vmem:[%s1 + $0x88] sm:$0xf]
    %v86 = vld [vmem:[%s1 + $0x8c] sm:$0xf]
    %v87 = vld [vmem:[%s1 + $0x90] sm:$0xf]
    %v88 = vld [vmem:[%s1 + $0x94] sm:$0xf]
    %v89 = vld [vmem:[%s1 + $0x98] sm:$0xf]
    %v90 = vld [vmem:[%s1 + $0x9c] sm:$0xf]
    %v91 = vld [vmem:[%s1 + $0xa0] sm:$0xf]
    %v92 = vld [vmem:[%s1 + $0xa4] sm:$0xf]
    %v93 = vld [vmem:[%s1 + $0xa8] sm:$0xf]
    %v94 = vld [vmem:[%s1 + $0xac] sm:$0xf]
    %v95 = vld [vmem:[%s1 + $0xb0] sm:$0xf]
    %v96 = vld [vmem:[%s1 + $0xb4] sm:$0xf]
    %v97 = vld [vmem:[%s1 + $0xb8] sm:$0xf]
    %v98 = vld [vmem:[%s1 + $0xbc] sm:$0xf]
    %v99 = vld [vmem:[%s0] sm:$0xfe]
    %v100 = vld [vmem:[%s0 + $0x8] sm:$0xfe]
    %v101 = vld [vmem:[%s0 + $0x10] sm:$0xfe]
    %v102 = vld [vmem:[%s0 + $0x18] sm:$0x1]
    %v103 = vld [vmem:[%s0 + $0x20] sm:$0x1]
    %v104 = vld [vmem:[%s0 + $0x28] sm:$0x1]
    %v105 = vld [vmem:[%s0 + $0x30] sm:$0xfe]
    %v106 = vld [vmem:[%s0 + $0x38] sm:$0xfe]
    %v107 = vld [vmem:[%s0 + $0x40] sm:$0xfe]
    %v108 = vld [vmem:[%s0 + $0x48] sm:$0x1]
    %v109 = vld [vmem:[%s0 + $0x50] sm:$0x1]
    %v110 = vld [vmem:[%s0 + $0x58] sm:$0x1]
    %v111 = vld [vmem:[%s0 + $0x60] sm:$0xfe]
    %v112 = vld [vmem:[%s0 + $0x68] sm:$0xfe]
    %v113 = vld [vmem:[%s0 + $0x70] sm:$0xfe]
    %v114 = vld [vmem:[%s0 + $0x78] sm:$0x1]
    %v115 = vld [vmem:[%s0 + $0x80] sm:$0x1]
    %v116 = vld [vmem:[%s0 + $0x88] sm:$0x1]
    %v117 = vld [vmem:[%s0 + $0x90] sm:$0xfe]
    %v118 = vld [vmem:[%s0 + $0x98] sm:$0xfe]
    %v119 = vld [vmem:[%s0 + $0xa0] sm:$0xfe]
    %v120 = vld [vmem:[%s0 + $0xa8] sm:$0x1]
    %v121 = vld [vmem:[%s0 + $0xb0] sm:$0x1]
    %v122 = vld [vmem:[%s0 + $0xb8] sm:$0x1]
    %v123 = vld [vmem:[%s0 + $0xc0] sm:$0xfe]
    %v124 = vld [vmem:[%s0 + $0xc8] sm:$0xfe]
    %v125 = vld [vmem:[%s0 + $0xd0] sm:$0xfe]
    %v126 = vld [vmem:[%s0 + $0xd8] sm:$0x1]
    %v127 = vld [vmem:[%s0 + $0xe0] sm:$0x1]
    %v128 = vld [vmem:[%s0 + $0xe8] sm:$0x1]
    %v129 = vld [vmem:[%s0 + $0xf0] sm:$0xfe]
    %v130 = vld [vmem:[%s0 + $0xf8] sm:$0xfe]
    %v131 = vld [vmem:[%s0 + $0x100] sm:$0xfe]
    %v132 = vld [vmem:[%s0 + $0x108] sm:$0x1]
    %v133 = vld [vmem:[%s0 + $0x110] sm:$0x1]
    %v134 = vld [vmem:[%s0 + $0x118] sm:$0x1]
    %v135 = vld [vmem:[%s0 + $0x120] sm:$0xfe]
    %v136 = vld [vmem:[%s0 + $0x128] sm:$0xfe]
    %v137 = vld [vmem:[%s0 + $0x130] sm:$0xfe]
    %v138 = vld [vmem:[%s0 + $0x138] sm:$0x1]
    %v139 = vld [vmem:[%s0 + $0x140] sm:$0x1]
    %v140 = vld [vmem:[%s0 + $0x148] sm:$0x1]
    %v141 = vld [vmem:[%s0 + $0x150] sm:$0xfe]
    %v142 = vld [vmem:[%s0 + $0x158] sm:$0xfe]
    %v143 = vld [vmem:[%s0 + $0x160] sm:$0xfe]
    %v144 = vld [vmem:[%s0 + $0x168] sm:$0x1]
    %v145 = vld [vmem:[%s0 + $0x170] sm:$0x1]
    %v146 = vld [vmem:[%s0 + $0x178] sm:$0x1]
    %vm195 = vcmask 1046528
    %v196 = vrot.slane %v99, 1
    %v197 = vrot.slane %v102, 1
    %v198 = vsel %vm195, %v196, %v197
    %v199 = vrot.slane %v100, 1
    %v200 = vrot.slane %v103, 1
    %v201 = vsel %vm195, %v199, %v200
    %v202 = vrot.slane %v101, 1
    %v203 = vrot.slane %v104, 1
    %v204 = vsel %vm195, %v202, %v203
    %v205 = vrot.slane %v105, 1
    %v206 = vrot.slane %v108, 1
    %v207 = vsel %vm195, %v205, %v206
    %v208 = vrot.slane %v106, 1
    %v209 = vrot.slane %v109, 1
    %v210 = vsel %vm195, %v208, %v209
    %v211 = vrot.slane %v107, 1
    %v212 = vrot.slane %v110, 1
    %v213 = vsel %vm195, %v211, %v212
    %v214 = vrot.slane %v111, 1
    %v215 = vrot.slane %v114, 1
    %v216 = vsel %vm195, %v214, %v215
    %v217 = vrot.slane %v112, 1
    %v218 = vrot.slane %v115, 1
    %v219 = vsel %vm195, %v217, %v218
    %v220 = vrot.slane %v113, 1
    %v221 = vrot.slane %v116, 1
    %v222 = vsel %vm195, %v220, %v221
    %v223 = vrot.slane %v117, 1
    %v224 = vrot.slane %v120, 1
    %v225 = vsel %vm195, %v223, %v224
    %v226 = vrot.slane %v118, 1
    %v227 = vrot.slane %v121, 1
    %v228 = vsel %vm195, %v226, %v227
    %v229 = vrot.slane %v119, 1
    %v230 = vrot.slane %v122, 1
    %v231 = vsel %vm195, %v229, %v230
    %v232 = vrot.slane %v123, 1
    %v233 = vrot.slane %v126, 1
    %v234 = vsel %vm195, %v232, %v233
    %v235 = vrot.slane %v124, 1
    %v236 = vrot.slane %v127, 1
    %v237 = vsel %vm195, %v235, %v236
    %v238 = vrot.slane %v125, 1
    %v239 = vrot.slane %v128, 1
    %v240 = vsel %vm195, %v238, %v239
    %v241 = vrot.slane %v129, 1
    %v242 = vrot.slane %v132, 1
    %v243 = vsel %vm195, %v241, %v242
    %v244 = vrot.slane %v130, 1
    %v245 = vrot.slane %v133, 1
    %v246 = vsel %vm195, %v244, %v245
    %v247 = vrot.slane %v131, 1
    %v248 = vrot.slane %v134, 1
    %v249 = vsel %vm195, %v247, %v248
    %v250 = vrot.slane %v135, 1
    %v251 = vrot.slane %v138, 1
    %v252 = vsel %vm195, %v250, %v251
    %v253 = vrot.slane %v136, 1
    %v254 = vrot.slane %v139, 1
    %v255 = vsel %vm195, %v253, %v254
    %v256 = vrot.slane %v137, 1
    %v257 = vrot.slane %v140, 1
    %v258 = vsel %vm195, %v256, %v257
    %v259 = vrot.slane %v141, 1
    %v260 = vrot.slane %v144, 1
    %v261 = vsel %vm195, %v259, %v260
    %v262 = vrot.slane %v142, 1
    %v263 = vrot.slane %v145, 1
    %v264 = vsel %vm195, %v262, %v263
    %v265 = vrot.slane %v143, 1
    %v266 = vrot.slane %v146, 1
    %v267 = vsel %vm195, %v265, %v266
    %v292 = vpack.c.bf16 %v207, %v198
    %v293 = vpack.c.bf16 %v210, %v201
    %v294 = vpack.c.bf16 %v213, %v204
    %v295 = vpack.c.bf16 %v225, %v216
    %v296 = vpack.c.bf16 %v228, %v219
    %v297 = vpack.c.bf16 %v231, %v222
    %v298 = vpack.c.bf16 %v243, %v234
    %v299 = vpack.c.bf16 %v246, %v237
    %v300 = vpack.c.bf16 %v249, %v240
    %v301 = vpack.c.bf16 %v261, %v252
    %v302 = vpack.c.bf16 %v264, %v255
    %v303 = vpack.c.bf16 %v267, %v258
    %s304 = scalar_lea.vmem %s1, 192
    %v305 = vld [vmem:[%s304] sm:$0xf]
    %v306 = vld [vmem:[%s304 + $0x4] sm:$0xf]
    %v307 = vld [vmem:[%s304 + $0x8] sm:$0xf]
    %v308 = vld [vmem:[%s304 + $0xc] sm:$0xf]
    %v309 = vld [vmem:[%s304 + $0x10] sm:$0xf]
    %v310 = vld [vmem:[%s304 + $0x14] sm:$0xf]
    %v311 = vld [vmem:[%s304 + $0x18] sm:$0xf]
    %v312 = vld [vmem:[%s304 + $0x1c] sm:$0xf]
    %v313 = vld [vmem:[%s304 + $0x20] sm:$0xf]
    %v314 = vld [vmem:[%s304 + $0x24] sm:$0xf]
    %v315 = vld [vmem:[%s304 + $0x28] sm:$0xf]
    %v316 = vld [vmem:[%s304 + $0x2c] sm:$0xf]
    %v317 = vld [vmem:[%s304 + $0x30] sm:$0xf]
    %v318 = vld [vmem:[%s304 + $0x34] sm:$0xf]
    %v319 = vld [vmem:[%s304 + $0x38] sm:$0xf]
    %v320 = vld [vmem:[%s304 + $0x3c] sm:$0xf]
    %v321 = vld [vmem:[%s304 + $0x40] sm:$0xf]
    %v322 = vld [vmem:[%s304 + $0x44] sm:$0xf]
    %v323 = vld [vmem:[%s304 + $0x48] sm:$0xf]
    %v324 = vld [vmem:[%s304 + $0x4c] sm:$0xf]
    %v325 = vld [vmem:[%s304 + $0x50] sm:$0xf]
    %v326 = vld [vmem:[%s304 + $0x54] sm:$0xf]
    %v327 = vld [vmem:[%s304 + $0x58] sm:$0xf]
    %v328 = vld [vmem:[%s304 + $0x5c] sm:$0xf]
    %v329 = vld [vmem:[%s304 + $0x60] sm:$0xf]
    %v330 = vld [vmem:[%s304 + $0x64] sm:$0xf]
    %v331 = vld [vmem:[%s304 + $0x68] sm:$0xf]
    %v332 = vld [vmem:[%s304 + $0x6c] sm:$0xf]
    %v333 = vld [vmem:[%s304 + $0x70] sm:$0xf]
    %v334 = vld [vmem:[%s304 + $0x74] sm:$0xf]
    %v335 = vld [vmem:[%s304 + $0x78] sm:$0xf]
    %v336 = vld [vmem:[%s304 + $0x7c] sm:$0xf]
    %v337 = vld [vmem:[%s304 + $0x80] sm:$0xf]
    %v338 = vld [vmem:[%s304 + $0x84] sm:$0xf]
    %v339 = vld [vmem:[%s304 + $0x88] sm:$0xf]
    %v340 = vld [vmem:[%s304 + $0x8c] sm:$0xf]
    %v341 = vld [vmem:[%s304 + $0x90] sm:$0xf]
    %v342 = vld [vmem:[%s304 + $0x94] sm:$0xf]
    %v343 = vld [vmem:[%s304 + $0x98] sm:$0xf]
    %v344 = vld [vmem:[%s304 + $0x9c] sm:$0xf]
    %v345 = vld [vmem:[%s304 + $0xa0] sm:$0xf]
    %v346 = vld [vmem:[%s304 + $0xa4] sm:$0xf]
    %v347 = vld [vmem:[%s304 + $0xa8] sm:$0xf]
    %v348 = vld [vmem:[%s304 + $0xac] sm:$0xf]
    %v349 = vld [vmem:[%s304 + $0xb0] sm:$0xf]
    %v350 = vld [vmem:[%s304 + $0xb4] sm:$0xf]
    %v351 = vld [vmem:[%s304 + $0xb8] sm:$0xf]
    %v352 = vld [vmem:[%s304 + $0xbc] sm:$0xf]
    %v401 = vunpack.c.l.b16 %v305
    %v402 = vunpack.c.l.b16 %v306
    %v403 = vunpack.c.l.b16 %v307
    %v404 = vunpack.c.l.b16 %v308
    %v405 = vunpack.c.l.b16 %v309
    %v406 = vunpack.c.l.b16 %v310
    %v407 = vunpack.c.l.b16 %v311
    %v408 = vunpack.c.l.b16 %v312
    %v409 = vunpack.c.l.b16 %v313
    %v410 = vunpack.c.l.b16 %v314
    %v411 = vunpack.c.l.b16 %v315
    %v412 = vunpack.c.l.b16 %v316
    %v413 = vunpack.c.l.b16 %v317
    %v414 = vunpack.c.l.b16 %v318
    %v415 = vunpack.c.l.b16 %v319
    %v416 = vunpack.c.l.b16 %v320
    %v417 = vunpack.c.l.b16 %v321
    %v418 = vunpack.c.l.b16 %v322
    %v419 = vunpack.c.l.b16 %v323
    %v420 = vunpack.c.l.b16 %v324
    %v421 = vunpack.c.l.b16 %v325
    %v422 = vunpack.c.l.b16 %v326
    %v423 = vunpack.c.l.b16 %v327
    %v424 = vunpack.c.l.b16 %v328
    %v425 = vunpack.c.l.b16 %v329
    %v426 = vunpack.c.l.b16 %v330
    %v427 = vunpack.c.l.b16 %v331
    %v428 = vunpack.c.l.b16 %v332
    %v429 = vunpack.c.l.b16 %v333
    %v430 = vunpack.c.l.b16 %v334
    %v431 = vunpack.c.l.b16 %v335
    %v432 = vunpack.c.l.b16 %v336
    %v433 = vunpack.c.l.b16 %v337
    %v434 = vunpack.c.l.b16 %v338
    %v435 = vunpack.c.l.b16 %v339
    %v436 = vunpack.c.l.b16 %v340
    %v437 = vunpack.c.l.b16 %v341
    %v438 = vunpack.c.l.b16 %v342
    %v439 = vunpack.c.l.b16 %v343
    %v440 = vunpack.c.l.b16 %v344
    %v441 = vunpack.c.l.b16 %v345
    %v442 = vunpack.c.l.b16 %v346
    %v443 = vunpack.c.l.b16 %v347
    %v444 = vunpack.c.l.b16 %v348
    %v445 = vunpack.c.l.b16 %v349
    %v446 = vunpack.c.l.b16 %v350
    %v447 = vunpack.c.l.b16 %v351
    %v448 = vunpack.c.l.b16 %v352
    %v449 = vpack.c.b16 %v402, %v401
    %v450 = vpack.c.b16 %v404, %v403
    %v451 = vpack.c.b16 %v406, %v405
    %v452 = vpack.c.b16 %v408, %v407
    %v453 = vpack.c.b16 %v410, %v409
    %v454 = vpack.c.b16 %v412, %v411
    %v455 = vpack.c.b16 %v414, %v413
    %v456 = vpack.c.b16 %v416, %v415
    %v457 = vpack.c.b16 %v418, %v417
    %v458 = vpack.c.b16 %v420, %v419
    %v459 = vpack.c.b16 %v422, %v421
    %v460 = vpack.c.b16 %v424, %v423
    %v461 = vpack.c.b16 %v426, %v425
    %v462 = vpack.c.b16 %v428, %v427
    %v463 = vpack.c.b16 %v430, %v429
    %v464 = vpack.c.b16 %v432, %v431
    %v465 = vpack.c.b16 %v434, %v433
    %v466 = vpack.c.b16 %v436, %v435
    %v467 = vpack.c.b16 %v438, %v437
    %v468 = vpack.c.b16 %v440, %v439
    %v469 = vpack.c.b16 %v442, %v441
    %v470 = vpack.c.b16 %v444, %v443
    %v471 = vpack.c.b16 %v446, %v445
    %v472 = vpack.c.b16 %v448, %v447
    %497 = vmatpush.bf16.msra.mxu0 %v456
    %498 = vmatpush.bf16.msra.mxu0 %v455
    %499 = vmatpush.bf16.msra.mxu0 %v454
    %500 = vmatpush.bf16.msra.mxu0 %v453
    %501 = vmatpush.bf16.msra.mxu0 %v452
    %502 = vmatpush.bf16.msra.mxu0 %v451
    %503 = vmatpush.bf16.msra.mxu0 %v450
    %504 = vmatpush.bf16.msra.mxu0 %v449
    %505 = vmatmul.bf16.gmra.mxu0 %v292
    %v506 = vpop.f32.mrf.mxu0
    %v507 = vadd.f32 0.0, %v506
    %v508 = vpop.f32.mrf.mxu0
    %v509 = vadd.f32 0.0, %v508
    %510 = vmatmul.bf16.gmra.mxu0 %v295
    %v511 = vpop.f32.mrf.mxu0
    %v512 = vadd.f32 0.0, %v511
    %v513 = vpop.f32.mrf.mxu0
    %v514 = vadd.f32 0.0, %v513
    %515 = vmatmul.bf16.gmra.mxu0 %v298
    %v516 = vpop.f32.mrf.mxu0
    %v517 = vadd.f32 0.0, %v516
    %v518 = vpop.f32.mrf.mxu0
    %v519 = vadd.f32 0.0, %v518
    %520 = vmatmul.bf16.gmra.mxu0 %v301
    %v521 = vpop.f32.mrf.mxu0
    %v522 = vadd.f32 0.0, %v521
    %v523 = vpop.f32.mrf.mxu0
    %v524 = vadd.f32 0.0, %v523
    %525 = vdwg.mxu0
    %526 = vmatpush.bf16.msra.mxu0 %v464
    %527 = vmatpush.bf16.msra.mxu0 %v463
    %528 = vmatpush.bf16.msra.mxu0 %v462
    %529 = vmatpush.bf16.msra.mxu0 %v461
    %530 = vmatpush.bf16.msra.mxu0 %v460
    %531 = vmatpush.bf16.msra.mxu0 %v459
    %532 = vmatpush.bf16.msra.mxu0 %v458
    %533 = vmatpush.bf16.msra.mxu0 %v457
    %534 = vmatmul.bf16.gmra.mxu0 %v293
    %v535 = vpop.f32.mrf.mxu0
    %v536 = vadd.f32 %v507, %v535
    %v537 = vpop.f32.mrf.mxu0
    %v538 = vadd.f32 %v509, %v537
    %539 = vmatmul.bf16.gmra.mxu0 %v296
    %v540 = vpop.f32.mrf.mxu0
    %v541 = vadd.f32 %v512, %v540
    %v542 = vpop.f32.mrf.mxu0
    %v543 = vadd.f32 %v514, %v542
    %544 = vmatmul.bf16.gmra.mxu0 %v299
    %v545 = vpop.f32.mrf.mxu0
    %v546 = vadd.f32 %v517, %v545
    %v547 = vpop.f32.mrf.mxu0
    %v548 = vadd.f32 %v519, %v547
    %549 = vmatmul.bf16.gmra.mxu0 %v302
    %v550 = vpop.f32.mrf.mxu0
    %v551 = vadd.f32 %v522, %v550
    %v552 = vpop.f32.mrf.mxu0
    %v553 = vadd.f32 %v524, %v552
    %554 = vdwg.mxu0
    %555 = vmatpush.bf16.msra.mxu0 %v472
    %556 = vmatpush.bf16.msra.mxu0 %v471
    %557 = vmatpush.bf16.msra.mxu0 %v470
    %558 = vmatpush.bf16.msra.mxu0 %v469
    %559 = vmatpush.bf16.msra.mxu0 %v468
    %560 = vmatpush.bf16.msra.mxu0 %v467
    %561 = vmatpush.bf16.msra.mxu0 %v466
    %562 = vmatpush.bf16.msra.mxu0 %v465
    %563 = vmatmul.bf16.gmra.mxu0 %v294
    %v564 = vpop.f32.mrf.mxu0
    %v565 = vadd.f32 %v536, %v564
    %v566 = vpop.f32.mrf.mxu0
    %v567 = vadd.f32 %v538, %v566
    %568 = vmatmul.bf16.gmra.mxu0 %v297
    %v569 = vpop.f32.mrf.mxu0
    %v570 = vadd.f32 %v541, %v569
    %v571 = vpop.f32.mrf.mxu0
    %v572 = vadd.f32 %v543, %v571
    %573 = vmatmul.bf16.gmra.mxu0 %v300
    %v574 = vpop.f32.mrf.mxu0
    %v575 = vadd.f32 %v546, %v574
    %v576 = vpop.f32.mrf.mxu0
    %v577 = vadd.f32 %v548, %v576
    %578 = vmatmul.bf16.gmra.mxu0 %v303
    %v579 = vpop.f32.mrf.mxu0
    %v580 = vadd.f32 %v551, %v579
    %v581 = vpop.f32.mrf.mxu0
    %v582 = vadd.f32 %v553, %v581
    %583 = vdwg.mxu0
    %v632 = vunpack.c.l.b16 %v51
    %v633 = vunpack.c.l.b16 %v52
    %v634 = vunpack.c.l.b16 %v53
    %v635 = vunpack.c.l.b16 %v54
    %v636 = vunpack.c.l.b16 %v55
    %v637 = vunpack.c.l.b16 %v56
    %v638 = vunpack.c.l.b16 %v57
    %v639 = vunpack.c.l.b16 %v58
    %v640 = vunpack.c.l.b16 %v59
    %v641 = vunpack.c.l.b16 %v60
    %v642 = vunpack.c.l.b16 %v61
    %v643 = vunpack.c.l.b16 %v62
    %v644 = vunpack.c.l.b16 %v63
    %v645 = vunpack.c.l.b16 %v64
    %v646 = vunpack.c.l.b16 %v65
    %v647 = vunpack.c.l.b16 %v66
    %v648 = vunpack.c.l.b16 %v67
    %v649 = vunpack.c.l.b16 %v68
    %v650 = vunpack.c.l.b16 %v69
    %v651 = vunpack.c.l.b16 %v70
    %v652 = vunpack.c.l.b16 %v71
    %v653 = vunpack.c.l.b16 %v72
    %v654 = vunpack.c.l.b16 %v73
    %v655 = vunpack.c.l.b16 %v74
    %v656 = vunpack.c.l.b16 %v75
    %v657 = vunpack.c.l.b16 %v76
    %v658 = vunpack.c.l.b16 %v77
    %v659 = vunpack.c.l.b16 %v78
    %v660 = vunpack.c.l.b16 %v79
    %v661 = vunpack.c.l.b16 %v80
    %v662 = vunpack.c.l.b16 %v81
    %v663 = vunpack.c.l.b16 %v82
    %v664 = vunpack.c.l.b16 %v83
    %v665 = vunpack.c.l.b16 %v84
    %v666 = vunpack.c.l.b16 %v85
    %v667 = vunpack.c.l.b16 %v86
    %v668 = vunpack.c.l.b16 %v87
    %v669 = vunpack.c.l.b16 %v88
    %v670 = vunpack.c.l.b16 %v89
    %v671 = vunpack.c.l.b16 %v90
    %v672 = vunpack.c.l.b16 %v91
    %v673 = vunpack.c.l.b16 %v92
    %v674 = vunpack.c.l.b16 %v93
    %v675 = vunpack.c.l.b16 %v94
    %v676 = vunpack.c.l.b16 %v95
    %v677 = vunpack.c.l.b16 %v96
    %v678 = vunpack.c.l.b16 %v97
    %v679 = vunpack.c.l.b16 %v98
    %v680 = vpack.c.b16 %v633, %v632
    %v681 = vpack.c.b16 %v635, %v634
    %v682 = vpack.c.b16 %v637, %v636
    %v683 = vpack.c.b16 %v639, %v638
    %v684 = vpack.c.b16 %v641, %v640
    %v685 = vpack.c.b16 %v643, %v642
    %v686 = vpack.c.b16 %v645, %v644
    %v687 = vpack.c.b16 %v647, %v646
    %v688 = vpack.c.b16 %v649, %v648
    %v689 = vpack.c.b16 %v651, %v650
    %v690 = vpack.c.b16 %v653, %v652
    %v691 = vpack.c.b16 %v655, %v654
    %v692 = vpack.c.b16 %v657, %v656
    %v693 = vpack.c.b16 %v659, %v658
    %v694 = vpack.c.b16 %v661, %v660
    %v695 = vpack.c.b16 %v663, %v662
    %v696 = vpack.c.b16 %v665, %v664
    %v697 = vpack.c.b16 %v667, %v666
    %v698 = vpack.c.b16 %v669, %v668
    %v699 = vpack.c.b16 %v671, %v670
    %v700 = vpack.c.b16 %v673, %v672
    %v701 = vpack.c.b16 %v675, %v674
    %v702 = vpack.c.b16 %v677, %v676
    %v703 = vpack.c.b16 %v679, %v678
    %728 = vmatpush.bf16.msra.mxu0 %v687
    %729 = vmatpush.bf16.msra.mxu0 %v686
    %730 = vmatpush.bf16.msra.mxu0 %v685
    %731 = vmatpush.bf16.msra.mxu0 %v684
    %732 = vmatpush.bf16.msra.mxu0 %v683
    %733 = vmatpush.bf16.msra.mxu0 %v682
    %734 = vmatpush.bf16.msra.mxu0 %v681
    %735 = vmatpush.bf16.msra.mxu0 %v680
    %736 = vmatmul.bf16.gmra.mxu0 %v39
    %v737 = vpop.f32.mrf.mxu0
    %v738 = vadd.f32 %v565, %v737
    %v739 = vpop.f32.mrf.mxu0
    %v740 = vadd.f32 %v567, %v739
    %741 = vmatmul.bf16.gmra.mxu0 %v42
    %v742 = vpop.f32.mrf.mxu0
    %v743 = vadd.f32 %v570, %v742
    %v744 = vpop.f32.mrf.mxu0
    %v745 = vadd.f32 %v572, %v744
    %746 = vmatmul.bf16.gmra.mxu0 %v45
    %v747 = vpop.f32.mrf.mxu0
    %v748 = vadd.f32 %v575, %v747
    %v749 = vpop.f32.mrf.mxu0
    %v750 = vadd.f32 %v577, %v749
    %751 = vmatmul.bf16.gmra.mxu0 %v48
    %v752 = vpop.f32.mrf.mxu0
    %v753 = vadd.f32 %v580, %v752
    %v754 = vpop.f32.mrf.mxu0
    %v755 = vadd.f32 %v582, %v754
    %756 = vdwg.mxu0
    %757 = vmatpush.bf16.msra.mxu0 %v695
    %758 = vmatpush.bf16.msra.mxu0 %v694
    %759 = vmatpush.bf16.msra.mxu0 %v693
    %760 = vmatpush.bf16.msra.mxu0 %v692
    %761 = vmatpush.bf16.msra.mxu0 %v691
    %762 = vmatpush.bf16.msra.mxu0 %v690
    %763 = vmatpush.bf16.msra.mxu0 %v689
    %764 = vmatpush.bf16.msra.mxu0 %v688
    %765 = vmatmul.bf16.gmra.mxu0 %v40
    %v766 = vpop.f32.mrf.mxu0
    %v767 = vadd.f32 %v738, %v766
    %v768 = vpop.f32.mrf.mxu0
    %v769 = vadd.f32 %v740, %v768
    %770 = vmatmul.bf16.gmra.mxu0 %v43
    %v771 = vpop.f32.mrf.mxu0
    %v772 = vadd.f32 %v743, %v771
    %v773 = vpop.f32.mrf.mxu0
    %v774 = vadd.f32 %v745, %v773
    %775 = vmatmul.bf16.gmra.mxu0 %v46
    %v776 = vpop.f32.mrf.mxu0
    %v777 = vadd.f32 %v748, %v776
    %v778 = vpop.f32.mrf.mxu0
    %v779 = vadd.f32 %v750, %v778
    %780 = vmatmul.bf16.gmra.mxu0 %v49
    %v781 = vpop.f32.mrf.mxu0
    %v782 = vadd.f32 %v753, %v781
    %v783 = vpop.f32.mrf.mxu0
    %v784 = vadd.f32 %v755, %v783
    %785 = vdwg.mxu0
    %786 = vmatpush.bf16.msra.mxu0 %v703
    %787 = vmatpush.bf16.msra.mxu0 %v702
    %788 = vmatpush.bf16.msra.mxu0 %v701
    %789 = vmatpush.bf16.msra.mxu0 %v700
    %790 = vmatpush.bf16.msra.mxu0 %v699
    %791 = vmatpush.bf16.msra.mxu0 %v698
    %792 = vmatpush.bf16.msra.mxu0 %v697
    %793 = vmatpush.bf16.msra.mxu0 %v696
    %794 = vmatmul.bf16.gmra.mxu0 %v41
    %v795 = vpop.f32.mrf.mxu0
    %v796 = vadd.f32 %v767, %v795
    %v797 = vpop.f32.mrf.mxu0
    %v798 = vadd.f32 %v769, %v797
    %799 = vmatmul.bf16.gmra.mxu0 %v44
    %v800 = vpop.f32.mrf.mxu0
    %v801 = vadd.f32 %v772, %v800
    %v802 = vpop.f32.mrf.mxu0
    %v803 = vadd.f32 %v774, %v802
    %804 = vmatmul.bf16.gmra.mxu0 %v47
    %v805 = vpop.f32.mrf.mxu0
    %v806 = vadd.f32 %v777, %v805
    %v807 = vpop.f32.mrf.mxu0
    %v808 = vadd.f32 %v779, %v807
    %809 = vmatmul.bf16.gmra.mxu0 %v50
    %v810 = vpop.f32.mrf.mxu0
    %v811 = vadd.f32 %v782, %v810
    %v812 = vpop.f32.mrf.mxu0
    %v813 = vadd.f32 %v784, %v812
    %814 = vdwg.mxu0
    %v815 = vld [vmem:[%s0] sm:$0xfc]
    %v816 = vld [vmem:[%s0 + $0x8] sm:$0xfc]
    %v817 = vld [vmem:[%s0 + $0x10] sm:$0xfc]
    %v818 = vld [vmem:[%s0 + $0x18] sm:$0x3]
    %v819 = vld [vmem:[%s0 + $0x20] sm:$0x3]
    %v820 = vld [vmem:[%s0 + $0x28] sm:$0x3]
    %v821 = vld [vmem:[%s0 + $0x30] sm:$0xfc]
    %v822 = vld [vmem:[%s0 + $0x38] sm:$0xfc]
    %v823 = vld [vmem:[%s0 + $0x40] sm:$0xfc]
    %v824 = vld [vmem:[%s0 + $0x48] sm:$0x3]
    %v825 = vld [vmem:[%s0 + $0x50] sm:$0x3]
    %v826 = vld [vmem:[%s0 + $0x58] sm:$0x3]
    %v827 = vld [vmem:[%s0 + $0x60] sm:$0xfc]
    %v828 = vld [vmem:[%s0 + $0x68] sm:$0xfc]
    %v829 = vld [vmem:[%s0 + $0x70] sm:$0xfc]
    %v830 = vld [vmem:[%s0 + $0x78] sm:$0x3]
    %v831 = vld [vmem:[%s0 + $0x80] sm:$0x3]
    %v832 = vld [vmem:[%s0 + $0x88] sm:$0x3]
    %v833 = vld [vmem:[%s0 + $0x90] sm:$0xfc]
    %v834 = vld [vmem:[%s0 + $0x98] sm:$0xfc]
    %v835 = vld [vmem:[%s0 + $0xa0] sm:$0xfc]
    %v836 = vld [vmem:[%s0 + $0xa8] sm:$0x3]
    %v837 = vld [vmem:[%s0 + $0xb0] sm:$0x3]
    %v838 = vld [vmem:[%s0 + $0xb8] sm:$0x3]
    %v839 = vld [vmem:[%s0 + $0xc0] sm:$0xfc]
    %v840 = vld [vmem:[%s0 + $0xc8] sm:$0xfc]
    %v841 = vld [vmem:[%s0 + $0xd0] sm:$0xfc]
    %v842 = vld [vmem:[%s0 + $0xd8] sm:$0x3]
    %v843 = vld [vmem:[%s0 + $0xe0] sm:$0x3]
    %v844 = vld [vmem:[%s0 + $0xe8] sm:$0x3]
    %v845 = vld [vmem:[%s0 + $0xf0] sm:$0xfc]
    %v846 = vld [vmem:[%s0 + $0xf8] sm:$0xfc]
    %v847 = vld [vmem:[%s0 + $0x100] sm:$0xfc]
    %v848 = vld [vmem:[%s0 + $0x108] sm:$0x3]
    %v849 = vld [vmem:[%s0 + $0x110] sm:$0x3]
    %v850 = vld [vmem:[%s0 + $0x118] sm:$0x3]
    %v851 = vld [vmem:[%s0 + $0x120] sm:$0xfc]
    %v852 = vld [vmem:[%s0 + $0x128] sm:$0xfc]
    %v853 = vld [vmem:[%s0 + $0x130] sm:$0xfc]
    %v854 = vld [vmem:[%s0 + $0x138] sm:$0x3]
    %v855 = vld [vmem:[%s0 + $0x140] sm:$0x3]
    %v856 = vld [vmem:[%s0 + $0x148] sm:$0x3]
    %v857 = vld [vmem:[%s0 + $0x150] sm:$0xfc]
    %v858 = vld [vmem:[%s0 + $0x158] sm:$0xfc]
    %v859 = vld [vmem:[%s0 + $0x160] sm:$0xfc]
    %v860 = vld [vmem:[%s0 + $0x168] sm:$0x3]
    %v861 = vld [vmem:[%s0 + $0x170] sm:$0x3]
    %v862 = vld [vmem:[%s0 + $0x178] sm:$0x3]
    %vm911 = vcmask 1045504
    %v912 = vrot.slane %v815, 2
    %v913 = vrot.slane %v818, 2
    %v914 = vsel %vm911, %v912, %v913
    %v915 = vrot.slane %v816, 2
    %v916 = vrot.slane %v819, 2
    %v917 = vsel %vm911, %v915, %v916
    %v918 = vrot.slane %v817, 2
    %v919 = vrot.slane %v820, 2
    %v920 = vsel %vm911, %v918, %v919
    %v921 = vrot.slane %v821, 2
    %v922 = vrot.slane %v824, 2
    %v923 = vsel %vm911, %v921, %v922
    %v924 = vrot.slane %v822, 2
    %v925 = vrot.slane %v825, 2
    %v926 = vsel %vm911, %v924, %v925
    %v927 = vrot.slane %v823, 2
    %v928 = vrot.slane %v826, 2
    %v929 = vsel %vm911, %v927, %v928
    %v930 = vrot.slane %v827, 2
    %v931 = vrot.slane %v830, 2
    %v932 = vsel %vm911, %v930, %v931
    %v933 = vrot.slane %v828, 2
    %v934 = vrot.slane %v831, 2
    %v935 = vsel %vm911, %v933, %v934
    %v936 = vrot.slane %v829, 2
    %v937 = vrot.slane %v832, 2
    %v938 = vsel %vm911, %v936, %v937
    %v939 = vrot.slane %v833, 2
    %v940 = vrot.slane %v836, 2
    %v941 = vsel %vm911, %v939, %v940
    %v942 = vrot.slane %v834, 2
    %v943 = vrot.slane %v837, 2
    %v944 = vsel %vm911, %v942, %v943
    %v945 = vrot.slane %v835, 2
    %v946 = vrot.slane %v838, 2
    %v947 = vsel %vm911, %v945, %v946
    %v948 = vrot.slane %v839, 2
    %v949 = vrot.slane %v842, 2
    %v950 = vsel %vm911, %v948, %v949
    %v951 = vrot.slane %v840, 2
    %v952 = vrot.slane %v843, 2
    %v953 = vsel %vm911, %v951, %v952
    %v954 = vrot.slane %v841, 2
    %v955 = vrot.slane %v844, 2
    %v956 = vsel %vm911, %v954, %v955
    %v957 = vrot.slane %v845, 2
    %v958 = vrot.slane %v848, 2
    %v959 = vsel %vm911, %v957, %v958
    %v960 = vrot.slane %v846, 2
    %v961 = vrot.slane %v849, 2
    %v962 = vsel %vm911, %v960, %v961
    %v963 = vrot.slane %v847, 2
    %v964 = vrot.slane %v850, 2
    %v965 = vsel %vm911, %v963, %v964
    %v966 = vrot.slane %v851, 2
    %v967 = vrot.slane %v854, 2
    %v968 = vsel %vm911, %v966, %v967
    %v969 = vrot.slane %v852, 2
    %v970 = vrot.slane %v855, 2
    %v971 = vsel %vm911, %v969, %v970
    %v972 = vrot.slane %v853, 2
    %v973 = vrot.slane %v856, 2
    %v974 = vsel %vm911, %v972, %v973
    %v975 = vrot.slane %v857, 2
    %v976 = vrot.slane %v860, 2
    %v977 = vsel %vm911, %v975, %v976
    %v978 = vrot.slane %v858, 2
    %v979 = vrot.slane %v861, 2
    %v980 = vsel %vm911, %v978, %v979
    %v981 = vrot.slane %v859, 2
    %v982 = vrot.slane %v862, 2
    %v983 = vsel %vm911, %v981, %v982
    %v1008 = vpack.c.bf16 %v923, %v914
    %v1009 = vpack.c.bf16 %v926, %v917
    %v1010 = vpack.c.bf16 %v929, %v920
    %v1011 = vpack.c.bf16 %v941, %v932
    %v1012 = vpack.c.bf16 %v944, %v935
    %v1013 = vpack.c.bf16 %v947, %v938
    %v1014 = vpack.c.bf16 %v959, %v950
    %v1015 = vpack.c.bf16 %v962, %v953
    %v1016 = vpack.c.bf16 %v965, %v956
    %v1017 = vpack.c.bf16 %v977, %v968
    %v1018 = vpack.c.bf16 %v980, %v971
    %v1019 = vpack.c.bf16 %v983, %v974
    %s1020 = scalar_lea.vmem %s1, 384
    %v1021 = vld [vmem:[%s1020] sm:$0xf]
    %v1022 = vld [vmem:[%s1020 + $0x4] sm:$0xf]
    %v1023 = vld [vmem:[%s1020 + $0x8] sm:$0xf]
    %v1024 = vld [vmem:[%s1020 + $0xc] sm:$0xf]
    %v1025 = vld [vmem:[%s1020 + $0x10] sm:$0xf]
    %v1026 = vld [vmem:[%s1020 + $0x14] sm:$0xf]
    %v1027 = vld [vmem:[%s1020 + $0x18] sm:$0xf]
    %v1028 = vld [vmem:[%s1020 + $0x1c] sm:$0xf]
    %v1029 = vld [vmem:[%s1020 + $0x20] sm:$0xf]
    %v1030 = vld [vmem:[%s1020 + $0x24] sm:$0xf]
    %v1031 = vld [vmem:[%s1020 + $0x28] sm:$0xf]
    %v1032 = vld [vmem:[%s1020 + $0x2c] sm:$0xf]
    %v1033 = vld [vmem:[%s1020 + $0x30] sm:$0xf]
    %v1034 = vld [vmem:[%s1020 + $0x34] sm:$0xf]
    %v1035 = vld [vmem:[%s1020 + $0x38] sm:$0xf]
    %v1036 = vld [vmem:[%s1020 + $0x3c] sm:$0xf]
    %v1037 = vld [vmem:[%s1020 + $0x40] sm:$0xf]
    %v1038 = vld [vmem:[%s1020 + $0x44] sm:$0xf]
    %v1039 = vld [vmem:[%s1020 + $0x48] sm:$0xf]
    %v1040 = vld [vmem:[%s1020 + $0x4c] sm:$0xf]
    %v1041 = vld [vmem:[%s1020 + $0x50] sm:$0xf]
    %v1042 = vld [vmem:[%s1020 + $0x54] sm:$0xf]
    %v1043 = vld [vmem:[%s1020 + $0x58] sm:$0xf]
    %v1044 = vld [vmem:[%s1020 + $0x5c] sm:$0xf]
    %v1045 = vld [vmem:[%s1020 + $0x60] sm:$0xf]
    %v1046 = vld [vmem:[%s1020 + $0x64] sm:$0xf]
    %v1047 = vld [vmem:[%s1020 + $0x68] sm:$0xf]
    %v1048 = vld [vmem:[%s1020 + $0x6c] sm:$0xf]
    %v1049 = vld [vmem:[%s1020 + $0x70] sm:$0xf]
    %v1050 = vld [vmem:[%s1020 + $0x74] sm:$0xf]
    %v1051 = vld [vmem:[%s1020 + $0x78] sm:$0xf]
    %v1052 = vld [vmem:[%s1020 + $0x7c] sm:$0xf]
    %v1053 = vld [vmem:[%s1020 + $0x80] sm:$0xf]
    %v1054 = vld [vmem:[%s1020 + $0x84] sm:$0xf]
    %v1055 = vld [vmem:[%s1020 + $0x88] sm:$0xf]
    %v1056 = vld [vmem:[%s1020 + $0x8c] sm:$0xf]
    %v1057 = vld [vmem:[%s1020 + $0x90] sm:$0xf]
    %v1058 = vld [vmem:[%s1020 + $0x94] sm:$0xf]
    %v1059 = vld [vmem:[%s1020 + $0x98] sm:$0xf]
    %v1060 = vld [vmem:[%s1020 + $0x9c] sm:$0xf]
    %v1061 = vld [vmem:[%s1020 + $0xa0] sm:$0xf]
    %v1062 = vld [vmem:[%s1020 + $0xa4] sm:$0xf]
    %v1063 = vld [vmem:[%s1020 + $0xa8] sm:$0xf]
    %v1064 = vld [vmem:[%s1020 + $0xac] sm:$0xf]
    %v1065 = vld [vmem:[%s1020 + $0xb0] sm:$0xf]
    %v1066 = vld [vmem:[%s1020 + $0xb4] sm:$0xf]
    %v1067 = vld [vmem:[%s1020 + $0xb8] sm:$0xf]
    %v1068 = vld [vmem:[%s1020 + $0xbc] sm:$0xf]
    %v1117 = vunpack.c.l.b16 %v1021
    %v1118 = vunpack.c.l.b16 %v1022
    %v1119 = vunpack.c.l.b16 %v1023
    %v1120 = vunpack.c.l.b16 %v1024
    %v1121 = vunpack.c.l.b16 %v1025
    %v1122 = vunpack.c.l.b16 %v1026
    %v1123 = vunpack.c.l.b16 %v1027
    %v1124 = vunpack.c.l.b16 %v1028
    %v1125 = vunpack.c.l.b16 %v1029
    %v1126 = vunpack.c.l.b16 %v1030
    %v1127 = vunpack.c.l.b16 %v1031
    %v1128 = vunpack.c.l.b16 %v1032
    %v1129 = vunpack.c.l.b16 %v1033
    %v1130 = vunpack.c.l.b16 %v1034
    %v1131 = vunpack.c.l.b16 %v1035
    %v1132 = vunpack.c.l.b16 %v1036
    %v1133 = vunpack.c.l.b16 %v1037
    %v1134 = vunpack.c.l.b16 %v1038
    %v1135 = vunpack.c.l.b16 %v1039
    %v1136 = vunpack.c.l.b16 %v1040
    %v1137 = vunpack.c.l.b16 %v1041
    %v1138 = vunpack.c.l.b16 %v1042
    %v1139 = vunpack.c.l.b16 %v1043
    %v1140 = vunpack.c.l.b16 %v1044
    %v1141 = vunpack.c.l.b16 %v1045
    %v1142 = vunpack.c.l.b16 %v1046
    %v1143 = vunpack.c.l.b16 %v1047
    %v1144 = vunpack.c.l.b16 %v1048
    %v1145 = vunpack.c.l.b16 %v1049
    %v1146 = vunpack.c.l.b16 %v1050
    %v1147 = vunpack.c.l.b16 %v1051
    %v1148 = vunpack.c.l.b16 %v1052
    %v1149 = vunpack.c.l.b16 %v1053
    %v1150 = vunpack.c.l.b16 %v1054
    %v1151 = vunpack.c.l.b16 %v1055
    %v1152 = vunpack.c.l.b16 %v1056
    %v1153 = vunpack.c.l.b16 %v1057
    %v1154 = vunpack.c.l.b16 %v1058
    %v1155 = vunpack.c.l.b16 %v1059
    %v1156 = vunpack.c.l.b16 %v1060
    %v1157 = vunpack.c.l.b16 %v1061
    %v1158 = vunpack.c.l.b16 %v1062
    %v1159 = vunpack.c.l.b16 %v1063
    %v1160 = vunpack.c.l.b16 %v1064
    %v1161 = vunpack.c.l.b16 %v1065
    %v1162 = vunpack.c.l.b16 %v1066
    %v1163 = vunpack.c.l.b16 %v1067
    %v1164 = vunpack.c.l.b16 %v1068
    %v1165 = vpack.c.b16 %v1118, %v1117
    %v1166 = vpack.c.b16 %v1120, %v1119
    %v1167 = vpack.c.b16 %v1122, %v1121
    %v1168 = vpack.c.b16 %v1124, %v1123
    %v1169 = vpack.c.b16 %v1126, %v1125
    %v1170 = vpack.c.b16 %v1128, %v1127
    %v1171 = vpack.c.b16 %v1130, %v1129
    %v1172 = vpack.c.b16 %v1132, %v1131
    %v1173 = vpack.c.b16 %v1134, %v1133
    %v1174 = vpack.c.b16 %v1136, %v1135
    %v1175 = vpack.c.b16 %v1138, %v1137
    %v1176 = vpack.c.b16 %v1140, %v1139
    %v1177 = vpack.c.b16 %v1142, %v1141
    %v1178 = vpack.c.b16 %v1144, %v1143
    %v1179 = vpack.c.b16 %v1146, %v1145
    %v1180 = vpack.c.b16 %v1148, %v1147
    %v1181 = vpack.c.b16 %v1150, %v1149
    %v1182 = vpack.c.b16 %v1152, %v1151
    %v1183 = vpack.c.b16 %v1154, %v1153
    %v1184 = vpack.c.b16 %v1156, %v1155
    %v1185 = vpack.c.b16 %v1158, %v1157
    %v1186 = vpack.c.b16 %v1160, %v1159
    %v1187 = vpack.c.b16 %v1162, %v1161
    %v1188 = vpack.c.b16 %v1164, %v1163
    %1213 = vmatpush.bf16.msra.mxu0 %v1172
    %1214 = vmatpush.bf16.msra.mxu0 %v1171
    %1215 = vmatpush.bf16.msra.mxu0 %v1170
    %1216 = vmatpush.bf16.msra.mxu0 %v1169
    %1217 = vmatpush.bf16.msra.mxu0 %v1168
    %1218 = vmatpush.bf16.msra.mxu0 %v1167
    %1219 = vmatpush.bf16.msra.mxu0 %v1166
    %1220 = vmatpush.bf16.msra.mxu0 %v1165
    %1221 = vmatmul.bf16.gmra.mxu0 %v1008
    %v1222 = vpop.f32.mrf.mxu0
    %v1223 = vadd.f32 0.0, %v1222
    %v1224 = vpop.f32.mrf.mxu0
    %v1225 = vadd.f32 0.0, %v1224
    %1226 = vmatmul.bf16.gmra.mxu0 %v1011
    %v1227 = vpop.f32.mrf.mxu0
    %v1228 = vadd.f32 0.0, %v1227
    %v1229 = vpop.f32.mrf.mxu0
    %v1230 = vadd.f32 0.0, %v1229
    %1231 = vmatmul.bf16.gmra.mxu0 %v1014
    %v1232 = vpop.f32.mrf.mxu0
    %v1233 = vadd.f32 0.0, %v1232
    %v1234 = vpop.f32.mrf.mxu0
    %v1235 = vadd.f32 0.0, %v1234
    %1236 = vmatmul.bf16.gmra.mxu0 %v1017
    %v1237 = vpop.f32.mrf.mxu0
    %v1238 = vadd.f32 0.0, %v1237
    %v1239 = vpop.f32.mrf.mxu0
    %v1240 = vadd.f32 0.0, %v1239
    %1241 = vdwg.mxu0
    %1242 = vmatpush.bf16.msra.mxu0 %v1180
    %1243 = vmatpush.bf16.msra.mxu0 %v1179
    %1244 = vmatpush.bf16.msra.mxu0 %v1178
    %1245 = vmatpush.bf16.msra.mxu0 %v1177
    %1246 = vmatpush.bf16.msra.mxu0 %v1176
    %1247 = vmatpush.bf16.msra.mxu0 %v1175
    %1248 = vmatpush.bf16.msra.mxu0 %v1174
    %1249 = vmatpush.bf16.msra.mxu0 %v1173
    %1250 = vmatmul.bf16.gmra.mxu0 %v1009
    %v1251 = vpop.f32.mrf.mxu0
    %v1252 = vadd.f32 %v1223, %v1251
    %v1253 = vpop.f32.mrf.mxu0
    %v1254 = vadd.f32 %v1225, %v1253
    %1255 = vmatmul.bf16.gmra.mxu0 %v1012
    %v1256 = vpop.f32.mrf.mxu0
    %v1257 = vadd.f32 %v1228, %v1256
    %v1258 = vpop.f32.mrf.mxu0
    %v1259 = vadd.f32 %v1230, %v1258
    %1260 = vmatmul.bf16.gmra.mxu0 %v1015
    %v1261 = vpop.f32.mrf.mxu0
    %v1262 = vadd.f32 %v1233, %v1261
    %v1263 = vpop.f32.mrf.mxu0
    %v1264 = vadd.f32 %v1235, %v1263
    %1265 = vmatmul.bf16.gmra.mxu0 %v1018
    %v1266 = vpop.f32.mrf.mxu0
    %v1267 = vadd.f32 %v1238, %v1266
    %v1268 = vpop.f32.mrf.mxu0
    %v1269 = vadd.f32 %v1240, %v1268
    %1270 = vdwg.mxu0
    %1271 = vmatpush.bf16.msra.mxu0 %v1188
    %1272 = vmatpush.bf16.msra.mxu0 %v1187
    %1273 = vmatpush.bf16.msra.mxu0 %v1186
    %1274 = vmatpush.bf16.msra.mxu0 %v1185
    %1275 = vmatpush.bf16.msra.mxu0 %v1184
    %1276 = vmatpush.bf16.msra.mxu0 %v1183
    %1277 = vmatpush.bf16.msra.mxu0 %v1182
    %1278 = vmatpush.bf16.msra.mxu0 %v1181
    %1279 = vmatmul.bf16.gmra.mxu0 %v1010
    %v1280 = vpop.f32.mrf.mxu0
    %v1281 = vadd.f32 %v1252, %v1280
    %v1282 = vpop.f32.mrf.mxu0
    %v1283 = vadd.f32 %v1254, %v1282
    %1284 = vmatmul.bf16.gmra.mxu0 %v1013
    %v1285 = vpop.f32.mrf.mxu0
    %v1286 = vadd.f32 %v1257, %v1285
    %v1287 = vpop.f32.mrf.mxu0
    %v1288 = vadd.f32 %v1259, %v1287
    %1289 = vmatmul.bf16.gmra.mxu0 %v1016
    %v1290 = vpop.f32.mrf.mxu0
    %v1291 = vadd.f32 %v1262, %v1290
    %v1292 = vpop.f32.mrf.mxu0
    %v1293 = vadd.f32 %v1264, %v1292
    %1294 = vmatmul.bf16.gmra.mxu0 %v1019
    %v1295 = vpop.f32.mrf.mxu0
    %v1296 = vadd.f32 %v1267, %v1295
    %v1297 = vpop.f32.mrf.mxu0
    %v1298 = vadd.f32 %v1269, %v1297
    %1299 = vdwg.mxu0
    %v1300 = vadd.f32 %v796, %v1281
    %v1301 = vadd.f32 %v798, %v1283
    %v1302 = vadd.f32 %v801, %v1286
    %v1303 = vadd.f32 %v803, %v1288
    %v1304 = vadd.f32 %v806, %v1291
    %v1305 = vadd.f32 %v808, %v1293
    %v1306 = vadd.f32 %v811, %v1296
    %v1307 = vadd.f32 %v813, %v1298
    %v1308 = vld [vmem:[%s2] sm:$0x1]
    %v1310 = vperm.slane %v1308, 0
    %v1312 = vadd.f32 %v1300, %v1310
    %v1313 = vadd.f32 %v1301, %v1310
    %v1314 = vadd.f32 %v1302, %v1310
    %v1315 = vadd.f32 %v1303, %v1310
    %v1316 = vadd.f32 %v1304, %v1310
    %v1317 = vadd.f32 %v1305, %v1310
    %v1318 = vadd.f32 %v1306, %v1310
    %v1319 = vadd.f32 %v1307, %v1310
    %v1320 = vmax.f32 %v1312, 0.0
    %v1321 = vmax.f32 %v1313, 0.0
    %v1322 = vmax.f32 %v1314, 0.0
    %v1323 = vmax.f32 %v1315, 0.0
    %v1324 = vmax.f32 %v1316, 0.0
    %v1325 = vmax.f32 %v1317, 0.0
    %v1326 = vmax.f32 %v1318, 0.0
    %v1327 = vmax.f32 %v1319, 0.0
    %v1328 = vrot.slane %v1320, 4
    %v1329 = vmax.f32 %v1320, %v1328
    %v1330 = vrot.slane %v1329, 2
    %v1331 = vmax.f32 %v1329, %v1330
    %v1332 = vrot.slane %v1331, 1
    %v1333 = vmax.f32 %v1331, %v1332
    %v1334 = vrot.slane %v1321, 4
    %v1335 = vmax.f32 %v1321, %v1334
    %v1336 = vrot.slane %v1335, 2
    %v1337 = vmax.f32 %v1335, %v1336
    %v1338 = vrot.slane %v1337, 1
    %v1339 = vmax.f32 %v1337, %v1338
    %v1340 = vrot.slane %v1322, 4
    %v1341 = vmax.f32 %v1322, %v1340
    %v1342 = vrot.slane %v1341, 2
    %v1343 = vmax.f32 %v1341, %v1342
    %v1344 = vrot.slane %v1343, 1
    %v1345 = vmax.f32 %v1343, %v1344
    %v1346 = vrot.slane %v1323, 4
    %v1347 = vmax.f32 %v1323, %v1346
    %v1348 = vrot.slane %v1347, 2
    %v1349 = vmax.f32 %v1347, %v1348
    %v1350 = vrot.slane %v1349, 1
    %v1351 = vmax.f32 %v1349, %v1350
    %v1352 = vrot.slane %v1324, 4
    %v1353 = vmax.f32 %v1324, %v1352
    %v1354 = vrot.slane %v1353, 2
    %v1355 = vmax.f32 %v1353, %v1354
    %v1356 = vrot.slane %v1355, 1
    %v1357 = vmax.f32 %v1355, %v1356
    %v1358 = vrot.slane %v1325, 4
    %v1359 = vmax.f32 %v1325, %v1358
    %v1360 = vrot.slane %v1359, 2
    %v1361 = vmax.f32 %v1359, %v1360
    %v1362 = vrot.slane %v1361, 1
    %v1363 = vmax.f32 %v1361, %v1362
    %v1364 = vrot.slane %v1326, 4
    %v1365 = vmax.f32 %v1326, %v1364
    %v1366 = vrot.slane %v1365, 2
    %v1367 = vmax.f32 %v1365, %v1366
    %v1368 = vrot.slane %v1367, 1
    %v1369 = vmax.f32 %v1367, %v1368
    %v1370 = vrot.slane %v1327, 4
    %v1371 = vmax.f32 %v1327, %v1370
    %v1372 = vrot.slane %v1371, 2
    %v1373 = vmax.f32 %v1371, %v1372
    %v1374 = vrot.slane %v1373, 1
    %v1375 = vmax.f32 %v1373, %v1374
    %vm1384 = vcmask 1041409
    %v1385 = vsel %vm1384, %v1339, %v1333
    %vm1386 = vcmask 1042434
    %v1387 = vsel %vm1386, %v1345, %v1385
    %vm1388 = vcmask 1043459
    %v1389 = vsel %vm1388, %v1351, %v1387
    %vm1390 = vcmask 1044484
    %v1391 = vsel %vm1390, %v1357, %v1389
    %vm1392 = vcmask 1045509
    %v1393 = vsel %vm1392, %v1363, %v1391
    %vm1394 = vcmask 1046534
    %v1395 = vsel %vm1394, %v1369, %v1393
    %vm1396 = vcmask 1047559
    %v1397 = vsel %vm1396, %v1375, %v1395
    %1399 = vst [vmem:[#allocation2] sm:$0xff] %v1397
    // Predicated region
    $region14: #{tpu_custom_call.1} parent=1 // pred_check
      _
    $region15: #{tpu_custom_call.1} parent=1 // pred_check_branch
      %1401 = sbr.rel (0) target = $region17
    $region16: #{tpu_custom_call.1} parent=1 // pred_region
      %1403 = vsyncadd [#allocation3], 0
      %s1405 = sshll.u32 [#allocation2], 4
      %s1406 = int_to_ptr.vmem [resolvable:$true] %s1405
      %s1407 = sshll.u32 %s3, 4
      %s1408 = int_to_ptr.hbm [resolvable:$true] %s1407
      %1410 = dma.vmem_to_hbm [thread:$0]  %s1406, 128, %s1408, [#allocation3]
    $region17: #{tpu_custom_call.1} parent=1 // pred_fallthru
      _
    // Predicated region
    $region18: #{tpu_custom_call.1} parent=1 // pred_check
      _
    $region19: #{tpu_custom_call.1} parent=1 // pred_check_branch
      %1412 = sbr.rel (0) target = $region21
    $region20: #{tpu_custom_call.1} parent=1 // pred_region
      %1414 = dma.done [#allocation3], 128
    $region21: #{tpu_custom_call.1} parent=1 // pred_fallthru
      _
    %1415 = vsyncpa [#allocation3], 1

</llo_original>
